<compile_context>
chip_gen: v7x
topology: tpu7x:2x2x1
jax: 0.10.0
libtpu: 0.0.40
codegen_flags: <defaults>
</compile_context>

<pallas_src>
import functools
import math

import jax
import jax.numpy as jnp
from jax import lax
from jax.experimental import pallas as pl
from jax.experimental.pallas import tpu as pltpu


def _round_up(x, m):
    return ((x + m - 1) // m) * m


def _choose_T(seq_len, Bp, Hp):
    """Timesteps per grid step, sized so double-buffered xproj+y chunks fit a
    ~24 MiB streaming budget (safe on v5e/v6e/v7x once W is single-buffered)."""
    per_step_bytes = Bp * (3 * Hp + Hp) * 4      # f32 xproj row + y row
    budget = 24 * (1 << 20)                      # streamed, double-buffered
    T = budget // (2 * per_step_bytes)
    return int(max(1, min(T, 64, seq_len)))


def nbrc_kernel(xp_ref, h0_ref, w_ref, y_ref, h_scr, *, T, H):
    """Run T timesteps of the nBRC recurrence for one grid step.

    xp_ref : (T, Bp, 3*H) f32   precomputed input projections, biases folded in:
                                [x@U_c^T + b_c | x@U_a^T + b_a | x@U_h^T + b_h]
    h0_ref : (Bp, H)      f32   initial hidden state (whole array, VMEM resident)
    w_ref  : (H, 2*H)     bf16  fused recurrent weights [W_c^T | W_a^T]
    y_ref  : (T, Bp, H)   f32   outputs for this chunk of timesteps
    h_scr  : (Bp, H)      f32   hidden state carried across grid steps (scratch)
    """
    @pl.when(pl.program_id(0) == 0)
    def _():
        h_scr[...] = h0_ref[...]

    w = w_ref[...]  # hoist the (H, 2H) bf16 weight load out of the loop

    def step(i, h):
        xp = xp_ref[i]                                            # (Bp, 3H) f32
        # Single MXU push per step; bf16 operands, f32 accumulation.
        hw = jnp.dot(h.astype(jnp.bfloat16), w,
                     preferred_element_type=jnp.float32)          # (Bp, 2H) f32
        c = jax.nn.sigmoid(xp[:, 0:H] + hw[:, 0:H])
        a = 1.0 + jnp.tanh(xp[:, H:2 * H] + hw[:, H:2 * H])
        h_new = c * h + (1.0 - c) * jnp.tanh(xp[:, 2 * H:3 * H] + a * h)
        y_ref[i] = h_new
        return h_new

    # Bounded unroll: keeps LLO scheduling visibility without blowing the
    # 64-vreg file when T is large.
    h_scr[...] = lax.fori_loop(0, T, step, h_scr[...], unroll=min(T, 8))


@jax.jit
def nbrc_forward(x_seq, h0, params):
    """Run the nBRC recurrence over the whole sequence."""
    seq_len, batch, input_size = x_seq.shape
    hidden = h0.shape[1]
    U_c, W_c, b_c, U_a, W_a, b_a, U_h, b_h = params

    f32 = jnp.float32
    bf16 = jnp.bfloat16
    Bp = _round_up(batch, 8)          # sublane alignment
    Hp = _round_up(hidden, 128)       # lane alignment
    T = _choose_T(seq_len, Bp, Hp)    # timesteps per grid step
    Sp = _round_up(seq_len, T)

    def pad_u(u):   # (H, I) -> (I, Hp), transposed so the GEMM is x @ U
        return jnp.pad(u.astype(f32).T, ((0, 0), (0, Hp - hidden)))

    def pad_b(b):   # (H,) -> (Hp,)
        return jnp.pad(b.astype(f32), (0, Hp - hidden))

    def pad_w(w):   # (H, H) -> (Hp, Hp), transposed so the recurrence is h @ W
        return jnp.pad(w.astype(f32).T, ((0, Hp - hidden), (0, Hp - hidden)))

    # Fused, padded weights.  W_cat in bf16 (MXU-native, half the push bytes).
    u_cat = jnp.concatenate([pad_u(U_c), pad_u(U_a), pad_u(U_h)], axis=1)    # (I, 3Hp)
    b_cat = jnp.concatenate([pad_b(b_c), pad_b(b_a), pad_b(b_h)])            # (3Hp,)
    w_cat = jnp.concatenate([pad_w(W_c), pad_w(W_a)], axis=1).astype(bf16)   # (Hp, 2Hp)

    # Pad the (small) input BEFORE the projection GEMM so the big xproj tensor
    # is emitted directly in its padded layout (no post-GEMM pad / HBM copy).
    x_pad = jnp.pad(x_seq.astype(f32),
                    ((0, Sp - seq_len), (0, Bp - batch), (0, 0)))            # (Sp, Bp, I)
    xproj = (jnp.dot(x_pad.reshape(Sp * Bp, input_size), u_cat)
             + b_cat).reshape(Sp, Bp, 3 * Hp)                                # f32
    # NOTE: xproj/y are kept f32 in HBM; on v5e, if the xproj DMA is exposed,
    # storing them in bf16 would halve that stream.

    h0p = jnp.pad(h0.astype(f32), ((0, Bp - batch), (0, Hp - hidden)))       # (Bp, Hp)

    kernel = functools.partial(nbrc_kernel, T=T, H=Hp)

    # Explicit VMEM budget: double-buffered streamed chunks + single-buffered
    # resident operands + scratch, with headroom.
    xproj_chunk = T * Bp * 3 * Hp * 4
    y_chunk = T * Bp * Hp * 4
    resident = Hp * 2 * Hp * 2 + Bp * Hp * 4 + Bp * Hp * 4   # w(bf16) + h0 + h_scr
    need = 2 * (xproj_chunk + y_chunk) + resident
    vmem_limit = int(min(100 * (1 << 20), max(16 * (1 << 20), 1.5 * need)))

    grid_spec = pltpu.PrefetchScalarGridSpec(
        num_scalar_prefetch=0,
        grid=(Sp // T,),
        in_specs=[
            # Streamed, pipelined chunk of input projections.
            pl.BlockSpec((T, Bp, 3 * Hp), lambda t: (t, 0, 0)),
            # Static operands: whole array in VMEM, single copy (no double
            # buffering -- the safe equivalent of Buffered(1)).
            pl.BlockSpec(memory_space=pltpu.MemorySpace.VMEM),   # h0
            pl.BlockSpec(memory_space=pltpu.MemorySpace.VMEM),   # W_cat (bf16)
        ],
        out_specs=pl.BlockSpec((T, Bp, Hp), lambda t: (t, 0, 0)),  # lane-dense y chunk
        scratch_shapes=[pltpu.VMEM((Bp, Hp), f32)],
    )

    y_full = pl.pallas_call(
        kernel,
        out_shape=jax.ShapeDtypeStruct((Sp, Bp, Hp), f32),
        grid_spec=grid_spec,
        compiler_params=pltpu.CompilerParams(
            dimension_semantics=("arbitrary",),    # recurrence -> sequential grid
            vmem_limit_bytes=vmem_limit),
    )(xproj, h0p, w_cat)

    y_seq = y_full[:seq_len, :batch, :hidden]
    hn = y_full[seq_len - 1, :batch, :hidden]
    return y_seq, hn


# ---------- deterministic parameter init (matches nn.init shapes) ----------

def xavier_uniform(key, shape):
    # shape = (fan_out, fan_in) like torch.empty(hidden, input)
    fan_out, fan_in = shape
    bound = math.sqrt(6.0 / (fan_in + fan_out))
    return jax.random.uniform(key, shape, jnp.float32, -bound, bound)


def init_params(key, input_size, hidden_size):
    ks = jax.random.split(key, 8)
    U_c = xavier_uniform(ks[0], (hidden_size, input_size))
    W_c = xavier_uniform(ks[1], (hidden_size, hidden_size))
    b_c = jax.random.normal(ks[2], (hidden_size,), jnp.float32)
    U_a = xavier_uniform(ks[3], (hidden_size, input_size))
    W_a = xavier_uniform(ks[4], (hidden_size, hidden_size))
    b_a = jax.random.normal(ks[5], (hidden_size,), jnp.float32)
    U_h = xavier_uniform(ks[6], (hidden_size, input_size))
    b_h = jax.random.normal(ks[7], (hidden_size,), jnp.float32)
    return (U_c, W_c, b_c, U_a, W_a, b_a, U_h, b_h)


# ---------- pure-JAX f32 reference (mirrors the PyTorch forward) ----------

def nbrc_reference(x_seq, h0, params):
    U_c, W_c, b_c, U_a, W_a, b_a, U_h, b_h = params

    def step(h, x):
        c = jax.nn.sigmoid(x @ U_c.T + h @ W_c.T + b_c)
        a = 1.0 + jnp.tanh(x @ U_a.T + h @ W_a.T + b_a)
        h = c * h + (1.0 - c) * jnp.tanh(x @ U_h.T + a * h + b_h)
        return h, h

    hn, y_seq = lax.scan(step, h0, x_seq)
    return y_seq, hn


if __name__ == "__main__":
    seq_len, batch, input_size, hidden_size = 8, 4, 16, 32

    key = jax.random.PRNGKey(0)
    k_params, k_x, k_h = jax.random.split(key, 3)

    params = init_params(k_params, input_size, hidden_size)
    x_seq = jax.random.normal(k_x, (seq_len, batch, input_size), jnp.float32)
    h0 = jax.random.normal(k_h, (batch, hidden_size), jnp.float32)

    y_seq, hn = nbrc_forward(x_seq, h0, params)
    y_seq = jax.block_until_ready(y_seq)
    hn = jax.block_until_ready(hn)

    y_ref, hn_ref = nbrc_reference(x_seq, h0, params)
    assert y_seq.shape == (seq_len, batch, hidden_size)
    assert hn.shape == (batch, hidden_size)
    # bf16 recurrent matmul (f32 accumulation / state): tolerance relaxed vs.
    # the pure-f32 reference, as flagged in the perf review.
    assert jnp.allclose(y_seq, y_ref, atol=3e-2, rtol=3e-2), "y_seq mismatch"
    assert jnp.allclose(hn, hn_ref, atol=3e-2, rtol=3e-2), "hn mismatch"

    print("KERNEL_OK")
</pallas_src>

<mosaic_0001>
module attributes {stable_mosaic.version = 11 : i64} {
  func.func @nbrc_kernel(%arg0: i32, %arg1: memref<8x8x384xf32, #tpu.memory_space<vmem>>, %arg2: memref<8x128xf32, #tpu.memory_space<vmem>>, %arg3: memref<128x256xbf16, #tpu.memory_space<vmem>>, %arg4: memref<8x8x128xf32, #tpu.memory_space<vmem>>, %arg5: memref<8x128xf32, #tpu.memory_space<vmem>>) attributes {dimension_semantics = [#tpu.dimension_semantics<arbitrary>], iteration_bounds = array<i64: 1>, scalar_prefetch = 0 : i64, scratch_operands = 1 : i64, tpu.core_type = #tpu.core_type<tc>, window_params = [{transform_indices = @transform_0, window_bounds = array<i64: 8, 8, 384>}, {pipeline_mode = #tpu.pipeline_mode<synchronous>, transform_indices = @transform_1, window_bounds = array<i64: 8, 128>}, {pipeline_mode = #tpu.pipeline_mode<synchronous>, transform_indices = @transform_2, window_bounds = array<i64: 128, 256>}, {transform_indices = @transform_3, window_bounds = array<i64: 8, 8, 128>}]} {
    %c0_i32 = arith.constant 0 : i32
    %0 = arith.cmpi eq, %arg0, %c0_i32 : i32
    %1 = arith.extui %0 : i1 to i32
    %c0_i32_0 = arith.constant 0 : i32
    %2 = arith.cmpi ne, %1, %c0_i32_0 : i32
    scf.if %2 {
      %c0_70 = arith.constant 0 : index
      %c0_71 = arith.constant 0 : index
      %262 = vector.load %arg2[%c0_70, %c0_71] : memref<8x128xf32, #tpu.memory_space<vmem>>, vector<8x128xf32>
      %c0_72 = arith.constant 0 : index
      %c0_73 = arith.constant 0 : index
      %263 = vector.load %arg5[%c0_72, %c0_73] : memref<8x128xf32, #tpu.memory_space<vmem>>, vector<8x128xf32>
      tpu.vector_store %arg5[%c0_72, %c0_73], %262 {strides = array<i32>} : memref<8x128xf32, #tpu.memory_space<vmem>>, vector<8x128xf32>,
    } else {
    }
    %c0 = arith.constant 0 : index
    %c0_1 = arith.constant 0 : index
    %3 = vector.load %arg3[%c0, %c0_1] : memref<128x256xbf16, #tpu.memory_space<vmem>>, vector<128x256xbf16>
    %c0_2 = arith.constant 0 : index
    %c0_3 = arith.constant 0 : index
    %4 = vector.load %arg5[%c0_2, %c0_3] : memref<8x128xf32, #tpu.memory_space<vmem>>, vector<8x128xf32>
    %c0_i32_4 = arith.constant 0 : i32
    %5 = arith.index_cast %c0_i32_4 : i32 to index
    %c0_5 = arith.constant 0 : index
    %c0_6 = arith.constant 0 : index
    %6 = vector.load %arg1[%5, %c0_5, %c0_6] : memref<8x8x384xf32, #tpu.memory_space<vmem>>, vector<1x8x384xf32>
    %7 = vector.shape_cast %6 : vector<1x8x384xf32> to vector<8x384xf32>
    %8 = arith.truncf %4 : vector<8x128xf32> to vector<8x128xbf16>
    %cst = arith.constant dense<0.000000e+00> : vector<8x256xf32>
    %9 = tpu.matmul %8, %3, %cst {dimension_numbers = #tpu.dot_dimension_numbers<[1], [0], [0], [1], [0, 0, 1, 1], [], []>} : vector<8x128xbf16>, vector<128x256xbf16>, vector<8x256xf32> -> vector<8x256xf32>
    %10 = vector.extract_strided_slice %7 {offsets = [0, 0], sizes = [8, 128], strides = [1, 1]} : vector<8x384xf32> to vector<8x128xf32>
    %11 = vector.extract_strided_slice %9 {offsets = [0, 0], sizes = [8, 128], strides = [1, 1]} : vector<8x256xf32> to vector<8x128xf32>
    %12 = arith.addf %10, %11 : vector<8x128xf32>
    %13 = arith.negf %12 : vector<8x128xf32>
    %14 = math.exp %13 : vector<8x128xf32>
    %cst_7 = arith.constant 1.000000e+00 : f32
    %15 = vector.broadcast %cst_7 : f32 to vector<8x128xf32>
    %16 = arith.addf %15, %14 : vector<8x128xf32>
    %17 = arith.divf %15, %16 : vector<8x128xf32>
    %18 = vector.extract_strided_slice %7 {offsets = [0, 128], sizes = [8, 128], strides = [1, 1]} : vector<8x384xf32> to vector<8x128xf32>
    %19 = vector.extract_strided_slice %9 {offsets = [0, 128], sizes = [8, 128], strides = [1, 1]} : vector<8x256xf32> to vector<8x128xf32>
    %20 = arith.addf %18, %19 : vector<8x128xf32>
    %21 = math.tanh %20 : vector<8x128xf32>
    %cst_8 = arith.constant 1.000000e+00 : f32
    %22 = vector.broadcast %cst_8 : f32 to vector<8x128xf32>
    %23 = arith.addf %22, %21 : vector<8x128xf32>
    %24 = arith.mulf %17, %4 : vector<8x128xf32>
    %cst_9 = arith.constant 1.000000e+00 : f32
    %25 = vector.broadcast %cst_9 : f32 to vector<8x128xf32>
    %26 = arith.subf %25, %17 : vector<8x128xf32>
    %27 = vector.extract_strided_slice %7 {offsets = [0, 256], sizes = [8, 128], strides = [1, 1]} : vector<8x384xf32> to vector<8x128xf32>
    %28 = arith.mulf %23, %4 : vector<8x128xf32>
    %29 = arith.addf %27, %28 : vector<8x128xf32>
    %30 = math.tanh %29 : vector<8x128xf32>
    %31 = arith.mulf %26, %30 : vector<8x128xf32>
    %32 = arith.addf %24, %31 : vector<8x128xf32>
    %33 = arith.index_cast %c0_i32_4 : i32 to index
    %c0_10 = arith.constant 0 : index
    %c0_11 = arith.constant 0 : index
    %34 = vector.load %arg4[%33, %c0_10, %c0_11] : memref<8x8x128xf32, #tpu.memory_space<vmem>>, vector<1x8x128xf32>
    %35 = vector.shape_cast %34 : vector<1x8x128xf32> to vector<8x128xf32>
    %36 = vector.shape_cast %32 : vector<8x128xf32> to vector<1x8x128xf32>
    tpu.vector_store %arg4[%33, %c0_10, %c0_11], %36 {strides = array<i32>} : memref<8x8x128xf32, #tpu.memory_space<vmem>>, vector<1x8x128xf32>,
    %c1_i32 = arith.constant 1 : i32
    %37 = arith.index_cast %c1_i32 : i32 to index
    %c0_12 = arith.constant 0 : index
    %c0_13 = arith.constant 0 : index
    %38 = vector.load %arg1[%37, %c0_12, %c0_13] : memref<8x8x384xf32, #tpu.memory_space<vmem>>, vector<1x8x384xf32>
    %39 = vector.shape_cast %38 : vector<1x8x384xf32> to vector<8x384xf32>
    %40 = arith.truncf %32 : vector<8x128xf32> to vector<8x128xbf16>
    %cst_14 = arith.constant dense<0.000000e+00> : vector<8x256xf32>
    %41 = tpu.matmul %40, %3, %cst_14 {dimension_numbers = #tpu.dot_dimension_numbers<[1], [0], [0], [1], [0, 0, 1, 1], [], []>} : vector<8x128xbf16>, vector<128x256xbf16>, vector<8x256xf32> -> vector<8x256xf32>
    %42 = vector.extract_strided_slice %39 {offsets = [0, 0], sizes = [8, 128], strides = [1, 1]} : vector<8x384xf32> to vector<8x128xf32>
    %43 = vector.extract_strided_slice %41 {offsets = [0, 0], sizes = [8, 128], strides = [1, 1]} : vector<8x256xf32> to vector<8x128xf32>
    %44 = arith.addf %42, %43 : vector<8x128xf32>
    %45 = arith.negf %44 : vector<8x128xf32>
    %46 = math.exp %45 : vector<8x128xf32>
    %cst_15 = arith.constant 1.000000e+00 : f32
    %47 = vector.broadcast %cst_15 : f32 to vector<8x128xf32>
    %48 = arith.addf %47, %46 : vector<8x128xf32>
    %49 = arith.divf %47, %48 : vector<8x128xf32>
    %50 = vector.extract_strided_slice %39 {offsets = [0, 128], sizes = [8, 128], strides = [1, 1]} : vector<8x384xf32> to vector<8x128xf32>
    %51 = vector.extract_strided_slice %41 {offsets = [0, 128], sizes = [8, 128], strides = [1, 1]} : vector<8x256xf32> to vector<8x128xf32>
    %52 = arith.addf %50, %51 : vector<8x128xf32>
    %53 = math.tanh %52 : vector<8x128xf32>
    %cst_16 = arith.constant 1.000000e+00 : f32
    %54 = vector.broadcast %cst_16 : f32 to vector<8x128xf32>
    %55 = arith.addf %54, %53 : vector<8x128xf32>
    %56 = arith.mulf %49, %32 : vector<8x128xf32>
    %cst_17 = arith.constant 1.000000e+00 : f32
    %57 = vector.broadcast %cst_17 : f32 to vector<8x128xf32>
    %58 = arith.subf %57, %49 : vector<8x128xf32>
    %59 = vector.extract_strided_slice %39 {offsets = [0, 256], sizes = [8, 128], strides = [1, 1]} : vector<8x384xf32> to vector<8x128xf32>
    %60 = arith.mulf %55, %32 : vector<8x128xf32>
    %61 = arith.addf %59, %60 : vector<8x128xf32>
    %62 = math.tanh %61 : vector<8x128xf32>
    %63 = arith.mulf %58, %62 : vector<8x128xf32>
    %64 = arith.addf %56, %63 : vector<8x128xf32>
    %65 = arith.index_cast %c1_i32 : i32 to index
    %c0_18 = arith.constant 0 : index
    %c0_19 = arith.constant 0 : index
    %66 = vector.load %arg4[%65, %c0_18, %c0_19] : memref<8x8x128xf32, #tpu.memory_space<vmem>>, vector<1x8x128xf32>
    %67 = vector.shape_cast %66 : vector<1x8x128xf32> to vector<8x128xf32>
    %68 = vector.shape_cast %64 : vector<8x128xf32> to vector<1x8x128xf32>
    tpu.vector_store %arg4[%65, %c0_18, %c0_19], %68 {strides = array<i32>} : memref<8x8x128xf32, #tpu.memory_space<vmem>>, vector<1x8x128xf32>,
    %c2_i32 = arith.constant 2 : i32
    %69 = arith.index_cast %c2_i32 : i32 to index
    %c0_20 = arith.constant 0 : index
    %c0_21 = arith.constant 0 : index
    %70 = vector.load %arg1[%69, %c0_20, %c0_21] : memref<8x8x384xf32, #tpu.memory_space<vmem>>, vector<1x8x384xf32>
    %71 = vector.shape_cast %70 : vector<1x8x384xf32> to vector<8x384xf32>
    %72 = arith.truncf %64 : vector<8x128xf32> to vector<8x128xbf16>
    %cst_22 = arith.constant dense<0.000000e+00> : vector<8x256xf32>
    %73 = tpu.matmul %72, %3, %cst_22 {dimension_numbers = #tpu.dot_dimension_numbers<[1], [0], [0], [1], [0, 0, 1, 1], [], []>} : vector<8x128xbf16>, vector<128x256xbf16>, vector<8x256xf32> -> vector<8x256xf32>
    %74 = vector.extract_strided_slice %71 {offsets = [0, 0], sizes = [8, 128], strides = [1, 1]} : vector<8x384xf32> to vector<8x128xf32>
    %75 = vector.extract_strided_slice %73 {offsets = [0, 0], sizes = [8, 128], strides = [1, 1]} : vector<8x256xf32> to vector<8x128xf32>
    %76 = arith.addf %74, %75 : vector<8x128xf32>
    %77 = arith.negf %76 : vector<8x128xf32>
    %78 = math.exp %77 : vector<8x128xf32>
    %cst_23 = arith.constant 1.000000e+00 : f32
    %79 = vector.broadcast %cst_23 : f32 to vector<8x128xf32>
    %80 = arith.addf %79, %78 : vector<8x128xf32>
    %81 = arith.divf %79, %80 : vector<8x128xf32>
    %82 = vector.extract_strided_slice %71 {offsets = [0, 128], sizes = [8, 128], strides = [1, 1]} : vector<8x384xf32> to vector<8x128xf32>
    %83 = vector.extract_strided_slice %73 {offsets = [0, 128], sizes = [8, 128], strides = [1, 1]} : vector<8x256xf32> to vector<8x128xf32>
    %84 = arith.addf %82, %83 : vector<8x128xf32>
    %85 = math.tanh %84 : vector<8x128xf32>
    %cst_24 = arith.constant 1.000000e+00 : f32
    %86 = vector.broadcast %cst_24 : f32 to vector<8x128xf32>
    %87 = arith.addf %86, %85 : vector<8x128xf32>
    %88 = arith.mulf %81, %64 : vector<8x128xf32>
    %cst_25 = arith.constant 1.000000e+00 : f32
    %89 = vector.broadcast %cst_25 : f32 to vector<8x128xf32>
    %90 = arith.subf %89, %81 : vector<8x128xf32>
    %91 = vector.extract_strided_slice %71 {offsets = [0, 256], sizes = [8, 128], strides = [1, 1]} : vector<8x384xf32> to vector<8x128xf32>
    %92 = arith.mulf %87, %64 : vector<8x128xf32>
    %93 = arith.addf %91, %92 : vector<8x128xf32>
    %94 = math.tanh %93 : vector<8x128xf32>
    %95 = arith.mulf %90, %94 : vector<8x128xf32>
    %96 = arith.addf %88, %95 : vector<8x128xf32>
    %97 = arith.index_cast %c2_i32 : i32 to index
    %c0_26 = arith.constant 0 : index
    %c0_27 = arith.constant 0 : index
    %98 = vector.load %arg4[%97, %c0_26, %c0_27] : memref<8x8x128xf32, #tpu.memory_space<vmem>>, vector<1x8x128xf32>
    %99 = vector.shape_cast %98 : vector<1x8x128xf32> to vector<8x128xf32>
    %100 = vector.shape_cast %96 : vector<8x128xf32> to vector<1x8x128xf32>
    tpu.vector_store %arg4[%97, %c0_26, %c0_27], %100 {strides = array<i32>} : memref<8x8x128xf32, #tpu.memory_space<vmem>>, vector<1x8x128xf32>,
    %c3_i32 = arith.constant 3 : i32
    %101 = arith.index_cast %c3_i32 : i32 to index
    %c0_28 = arith.constant 0 : index
    %c0_29 = arith.constant 0 : index
    %102 = vector.load %arg1[%101, %c0_28, %c0_29] : memref<8x8x384xf32, #tpu.memory_space<vmem>>, vector<1x8x384xf32>
    %103 = vector.shape_cast %102 : vector<1x8x384xf32> to vector<8x384xf32>
    %104 = arith.truncf %96 : vector<8x128xf32> to vector<8x128xbf16>
    %cst_30 = arith.constant dense<0.000000e+00> : vector<8x256xf32>
    %105 = tpu.matmul %104, %3, %cst_30 {dimension_numbers = #tpu.dot_dimension_numbers<[1], [0], [0], [1], [0, 0, 1, 1], [], []>} : vector<8x128xbf16>, vector<128x256xbf16>, vector<8x256xf32> -> vector<8x256xf32>
    %106 = vector.extract_strided_slice %103 {offsets = [0, 0], sizes = [8, 128], strides = [1, 1]} : vector<8x384xf32> to vector<8x128xf32>
    %107 = vector.extract_strided_slice %105 {offsets = [0, 0], sizes = [8, 128], strides = [1, 1]} : vector<8x256xf32> to vector<8x128xf32>
    %108 = arith.addf %106, %107 : vector<8x128xf32>
    %109 = arith.negf %108 : vector<8x128xf32>
    %110 = math.exp %109 : vector<8x128xf32>
    %cst_31 = arith.constant 1.000000e+00 : f32
    %111 = vector.broadcast %cst_31 : f32 to vector<8x128xf32>
    %112 = arith.addf %111, %110 : vector<8x128xf32>
    %113 = arith.divf %111, %112 : vector<8x128xf32>
    %114 = vector.extract_strided_slice %103 {offsets = [0, 128], sizes = [8, 128], strides = [1, 1]} : vector<8x384xf32> to vector<8x128xf32>
    %115 = vector.extract_strided_slice %105 {offsets = [0, 128], sizes = [8, 128], strides = [1, 1]} : vector<8x256xf32> to vector<8x128xf32>
    %116 = arith.addf %114, %115 : vector<8x128xf32>
    %117 = math.tanh %116 : vector<8x128xf32>
    %cst_32 = arith.constant 1.000000e+00 : f32
    %118 = vector.broadcast %cst_32 : f32 to vector<8x128xf32>
    %119 = arith.addf %118, %117 : vector<8x128xf32>
    %120 = arith.mulf %113, %96 : vector<8x128xf32>
    %cst_33 = arith.constant 1.000000e+00 : f32
    %121 = vector.broadcast %cst_33 : f32 to vector<8x128xf32>
    %122 = arith.subf %121, %113 : vector<8x128xf32>
    %123 = vector.extract_strided_slice %103 {offsets = [0, 256], sizes = [8, 128], strides = [1, 1]} : vector<8x384xf32> to vector<8x128xf32>
    %124 = arith.mulf %119, %96 : vector<8x128xf32>
    %125 = arith.addf %123, %124 : vector<8x128xf32>
    %126 = math.tanh %125 : vector<8x128xf32>
    %127 = arith.mulf %122, %126 : vector<8x128xf32>
    %128 = arith.addf %120, %127 : vector<8x128xf32>
    %129 = arith.index_cast %c3_i32 : i32 to index
    %c0_34 = arith.constant 0 : index
    %c0_35 = arith.constant 0 : index
    %130 = vector.load %arg4[%129, %c0_34, %c0_35] : memref<8x8x128xf32, #tpu.memory_space<vmem>>, vector<1x8x128xf32>
    %131 = vector.shape_cast %130 : vector<1x8x128xf32> to vector<8x128xf32>
    %132 = vector.shape_cast %128 : vector<8x128xf32> to vector<1x8x128xf32>
    tpu.vector_store %arg4[%129, %c0_34, %c0_35], %132 {strides = array<i32>} : memref<8x8x128xf32, #tpu.memory_space<vmem>>, vector<1x8x128xf32>,
    %c4_i32 = arith.constant 4 : i32
    %133 = arith.index_cast %c4_i32 : i32 to index
    %c0_36 = arith.constant 0 : index
    %c0_37 = arith.constant 0 : index
    %134 = vector.load %arg1[%133, %c0_36, %c0_37] : memref<8x8x384xf32, #tpu.memory_space<vmem>>, vector<1x8x384xf32>
    %135 = vector.shape_cast %134 : vector<1x8x384xf32> to vector<8x384xf32>
    %136 = arith.truncf %128 : vector<8x128xf32> to vector<8x128xbf16>
    %cst_38 = arith.constant dense<0.000000e+00> : vector<8x256xf32>
    %137 = tpu.matmul %136, %3, %cst_38 {dimension_numbers = #tpu.dot_dimension_numbers<[1], [0], [0], [1], [0, 0, 1, 1], [], []>} : vector<8x128xbf16>, vector<128x256xbf16>, vector<8x256xf32> -> vector<8x256xf32>
    %138 = vector.extract_strided_slice %135 {offsets = [0, 0], sizes = [8, 128], strides = [1, 1]} : vector<8x384xf32> to vector<8x128xf32>
    %139 = vector.extract_strided_slice %137 {offsets = [0, 0], sizes = [8, 128], strides = [1, 1]} : vector<8x256xf32> to vector<8x128xf32>
    %140 = arith.addf %138, %139 : vector<8x128xf32>
    %141 = arith.negf %140 : vector<8x128xf32>
    %142 = math.exp %141 : vector<8x128xf32>
    %cst_39 = arith.constant 1.000000e+00 : f32
    %143 = vector.broadcast %cst_39 : f32 to vector<8x128xf32>
    %144 = arith.addf %143, %142 : vector<8x128xf32>
    %145 = arith.divf %143, %144 : vector<8x128xf32>
    %146 = vector.extract_strided_slice %135 {offsets = [0, 128], sizes = [8, 128], strides = [1, 1]} : vector<8x384xf32> to vector<8x128xf32>
    %147 = vector.extract_strided_slice %137 {offsets = [0, 128], sizes = [8, 128], strides = [1, 1]} : vector<8x256xf32> to vector<8x128xf32>
    %148 = arith.addf %146, %147 : vector<8x128xf32>
    %149 = math.tanh %148 : vector<8x128xf32>
    %cst_40 = arith.constant 1.000000e+00 : f32
    %150 = vector.broadcast %cst_40 : f32 to vector<8x128xf32>
    %151 = arith.addf %150, %149 : vector<8x128xf32>
    %152 = arith.mulf %145, %128 : vector<8x128xf32>
    %cst_41 = arith.constant 1.000000e+00 : f32
    %153 = vector.broadcast %cst_41 : f32 to vector<8x128xf32>
    %154 = arith.subf %153, %145 : vector<8x128xf32>
    %155 = vector.extract_strided_slice %135 {offsets = [0, 256], sizes = [8, 128], strides = [1, 1]} : vector<8x384xf32> to vector<8x128xf32>
    %156 = arith.mulf %151, %128 : vector<8x128xf32>
    %157 = arith.addf %155, %156 : vector<8x128xf32>
    %158 = math.tanh %157 : vector<8x128xf32>
    %159 = arith.mulf %154, %158 : vector<8x128xf32>
    %160 = arith.addf %152, %159 : vector<8x128xf32>
    %161 = arith.index_cast %c4_i32 : i32 to index
    %c0_42 = arith.constant 0 : index
    %c0_43 = arith.constant 0 : index
    %162 = vector.load %arg4[%161, %c0_42, %c0_43] : memref<8x8x128xf32, #tpu.memory_space<vmem>>, vector<1x8x128xf32>
    %163 = vector.shape_cast %162 : vector<1x8x128xf32> to vector<8x128xf32>
    %164 = vector.shape_cast %160 : vector<8x128xf32> to vector<1x8x128xf32>
    tpu.vector_store %arg4[%161, %c0_42, %c0_43], %164 {strides = array<i32>} : memref<8x8x128xf32, #tpu.memory_space<vmem>>, vector<1x8x128xf32>,
    %c5_i32 = arith.constant 5 : i32
    %165 = arith.index_cast %c5_i32 : i32 to index
    %c0_44 = arith.constant 0 : index
    %c0_45 = arith.constant 0 : index
    %166 = vector.load %arg1[%165, %c0_44, %c0_45] : memref<8x8x384xf32, #tpu.memory_space<vmem>>, vector<1x8x384xf32>
    %167 = vector.shape_cast %166 : vector<1x8x384xf32> to vector<8x384xf32>
    %168 = arith.truncf %160 : vector<8x128xf32> to vector<8x128xbf16>
    %cst_46 = arith.constant dense<0.000000e+00> : vector<8x256xf32>
    %169 = tpu.matmul %168, %3, %cst_46 {dimension_numbers = #tpu.dot_dimension_numbers<[1], [0], [0], [1], [0, 0, 1, 1], [], []>} : vector<8x128xbf16>, vector<128x256xbf16>, vector<8x256xf32> -> vector<8x256xf32>
    %170 = vector.extract_strided_slice %167 {offsets = [0, 0], sizes = [8, 128], strides = [1, 1]} : vector<8x384xf32> to vector<8x128xf32>
    %171 = vector.extract_strided_slice %169 {offsets = [0, 0], sizes = [8, 128], strides = [1, 1]} : vector<8x256xf32> to vector<8x128xf32>
    %172 = arith.addf %170, %171 : vector<8x128xf32>
    %173 = arith.negf %172 : vector<8x128xf32>
    %174 = math.exp %173 : vector<8x128xf32>
    %cst_47 = arith.constant 1.000000e+00 : f32
    %175 = vector.broadcast %cst_47 : f32 to vector<8x128xf32>
    %176 = arith.addf %175, %174 : vector<8x128xf32>
    %177 = arith.divf %175, %176 : vector<8x128xf32>
    %178 = vector.extract_strided_slice %167 {offsets = [0, 128], sizes = [8, 128], strides = [1, 1]} : vector<8x384xf32> to vector<8x128xf32>
    %179 = vector.extract_strided_slice %169 {offsets = [0, 128], sizes = [8, 128], strides = [1, 1]} : vector<8x256xf32> to vector<8x128xf32>
    %180 = arith.addf %178, %179 : vector<8x128xf32>
    %181 = math.tanh %180 : vector<8x128xf32>
    %cst_48 = arith.constant 1.000000e+00 : f32
    %182 = vector.broadcast %cst_48 : f32 to vector<8x128xf32>
    %183 = arith.addf %182, %181 : vector<8x128xf32>
    %184 = arith.mulf %177, %160 : vector<8x128xf32>
    %cst_49 = arith.constant 1.000000e+00 : f32
    %185 = vector.broadcast %cst_49 : f32 to vector<8x128xf32>
    %186 = arith.subf %185, %177 : vector<8x128xf32>
    %187 = vector.extract_strided_slice %167 {offsets = [0, 256], sizes = [8, 128], strides = [1, 1]} : vector<8x384xf32> to vector<8x128xf32>
    %188 = arith.mulf %183, %160 : vector<8x128xf32>
    %189 = arith.addf %187, %188 : vector<8x128xf32>
    %190 = math.tanh %189 : vector<8x128xf32>
    %191 = arith.mulf %186, %190 : vector<8x128xf32>
    %192 = arith.addf %184, %191 : vector<8x128xf32>
    %193 = arith.index_cast %c5_i32 : i32 to index
    %c0_50 = arith.constant 0 : index
    %c0_51 = arith.constant 0 : index
    %194 = vector.load %arg4[%193, %c0_50, %c0_51] : memref<8x8x128xf32, #tpu.memory_space<vmem>>, vector<1x8x128xf32>
    %195 = vector.shape_cast %194 : vector<1x8x128xf32> to vector<8x128xf32>
    %196 = vector.shape_cast %192 : vector<8x128xf32> to vector<1x8x128xf32>
    tpu.vector_store %arg4[%193, %c0_50, %c0_51], %196 {strides = array<i32>} : memref<8x8x128xf32, #tpu.memory_space<vmem>>, vector<1x8x128xf32>,
    %c6_i32 = arith.constant 6 : i32
    %197 = arith.index_cast %c6_i32 : i32 to index
    %c0_52 = arith.constant 0 : index
    %c0_53 = arith.constant 0 : index
    %198 = vector.load %arg1[%197, %c0_52, %c0_53] : memref<8x8x384xf32, #tpu.memory_space<vmem>>, vector<1x8x384xf32>
    %199 = vector.shape_cast %198 : vector<1x8x384xf32> to vector<8x384xf32>
    %200 = arith.truncf %192 : vector<8x128xf32> to vector<8x128xbf16>
    %cst_54 = arith.constant dense<0.000000e+00> : vector<8x256xf32>
    %201 = tpu.matmul %200, %3, %cst_54 {dimension_numbers = #tpu.dot_dimension_numbers<[1], [0], [0], [1], [0, 0, 1, 1], [], []>} : vector<8x128xbf16>, vector<128x256xbf16>, vector<8x256xf32> -> vector<8x256xf32>
    %202 = vector.extract_strided_slice %199 {offsets = [0, 0], sizes = [8, 128], strides = [1, 1]} : vector<8x384xf32> to vector<8x128xf32>
    %203 = vector.extract_strided_slice %201 {offsets = [0, 0], sizes = [8, 128], strides = [1, 1]} : vector<8x256xf32> to vector<8x128xf32>
    %204 = arith.addf %202, %203 : vector<8x128xf32>
    %205 = arith.negf %204 : vector<8x128xf32>
    %206 = math.exp %205 : vector<8x128xf32>
    %cst_55 = arith.constant 1.000000e+00 : f32
    %207 = vector.broadcast %cst_55 : f32 to vector<8x128xf32>
    %208 = arith.addf %207, %206 : vector<8x128xf32>
    %209 = arith.divf %207, %208 : vector<8x128xf32>
    %210 = vector.extract_strided_slice %199 {offsets = [0, 128], sizes = [8, 128], strides = [1, 1]} : vector<8x384xf32> to vector<8x128xf32>
    %211 = vector.extract_strided_slice %201 {offsets = [0, 128], sizes = [8, 128], strides = [1, 1]} : vector<8x256xf32> to vector<8x128xf32>
    %212 = arith.addf %210, %211 : vector<8x128xf32>
    %213 = math.tanh %212 : vector<8x128xf32>
    %cst_56 = arith.constant 1.000000e+00 : f32
    %214 = vector.broadcast %cst_56 : f32 to vector<8x128xf32>
    %215 = arith.addf %214, %213 : vector<8x128xf32>
    %216 = arith.mulf %209, %192 : vector<8x128xf32>
    %cst_57 = arith.constant 1.000000e+00 : f32
    %217 = vector.broadcast %cst_57 : f32 to vector<8x128xf32>
    %218 = arith.subf %217, %209 : vector<8x128xf32>
    %219 = vector.extract_strided_slice %199 {offsets = [0, 256], sizes = [8, 128], strides = [1, 1]} : vector<8x384xf32> to vector<8x128xf32>
    %220 = arith.mulf %215, %192 : vector<8x128xf32>
    %221 = arith.addf %219, %220 : vector<8x128xf32>
    %222 = math.tanh %221 : vector<8x128xf32>
    %223 = arith.mulf %218, %222 : vector<8x128xf32>
    %224 = arith.addf %216, %223 : vector<8x128xf32>
    %225 = arith.index_cast %c6_i32 : i32 to index
    %c0_58 = arith.constant 0 : index
    %c0_59 = arith.constant 0 : index
    %226 = vector.load %arg4[%225, %c0_58, %c0_59] : memref<8x8x128xf32, #tpu.memory_space<vmem>>, vector<1x8x128xf32>
    %227 = vector.shape_cast %226 : vector<1x8x128xf32> to vector<8x128xf32>
    %228 = vector.shape_cast %224 : vector<8x128xf32> to vector<1x8x128xf32>
    tpu.vector_store %arg4[%225, %c0_58, %c0_59], %228 {strides = array<i32>} : memref<8x8x128xf32, #tpu.memory_space<vmem>>, vector<1x8x128xf32>,
    %c7_i32 = arith.constant 7 : i32
    %229 = arith.index_cast %c7_i32 : i32 to index
    %c0_60 = arith.constant 0 : index
    %c0_61 = arith.constant 0 : index
    %230 = vector.load %arg1[%229, %c0_60, %c0_61] : memref<8x8x384xf32, #tpu.memory_space<vmem>>, vector<1x8x384xf32>
    %231 = vector.shape_cast %230 : vector<1x8x384xf32> to vector<8x384xf32>
    %232 = arith.truncf %224 : vector<8x128xf32> to vector<8x128xbf16>
    %cst_62 = arith.constant dense<0.000000e+00> : vector<8x256xf32>
    %233 = tpu.matmul %232, %3, %cst_62 {dimension_numbers = #tpu.dot_dimension_numbers<[1], [0], [0], [1], [0, 0, 1, 1], [], []>} : vector<8x128xbf16>, vector<128x256xbf16>, vector<8x256xf32> -> vector<8x256xf32>
    %234 = vector.extract_strided_slice %231 {offsets = [0, 0], sizes = [8, 128], strides = [1, 1]} : vector<8x384xf32> to vector<8x128xf32>
    %235 = vector.extract_strided_slice %233 {offsets = [0, 0], sizes = [8, 128], strides = [1, 1]} : vector<8x256xf32> to vector<8x128xf32>
    %236 = arith.addf %234, %235 : vector<8x128xf32>
    %237 = arith.negf %236 : vector<8x128xf32>
    %238 = math.exp %237 : vector<8x128xf32>
    %cst_63 = arith.constant 1.000000e+00 : f32
    %239 = vector.broadcast %cst_63 : f32 to vector<8x128xf32>
    %240 = arith.addf %239, %238 : vector<8x128xf32>
    %241 = arith.divf %239, %240 : vector<8x128xf32>
    %242 = vector.extract_strided_slice %231 {offsets = [0, 128], sizes = [8, 128], strides = [1, 1]} : vector<8x384xf32> to vector<8x128xf32>
    %243 = vector.extract_strided_slice %233 {offsets = [0, 128], sizes = [8, 128], strides = [1, 1]} : vector<8x256xf32> to vector<8x128xf32>
    %244 = arith.addf %242, %243 : vector<8x128xf32>
    %245 = math.tanh %244 : vector<8x128xf32>
    %cst_64 = arith.constant 1.000000e+00 : f32
    %246 = vector.broadcast %cst_64 : f32 to vector<8x128xf32>
    %247 = arith.addf %246, %245 : vector<8x128xf32>
    %248 = arith.mulf %241, %224 : vector<8x128xf32>
    %cst_65 = arith.constant 1.000000e+00 : f32
    %249 = vector.broadcast %cst_65 : f32 to vector<8x128xf32>
    %250 = arith.subf %249, %241 : vector<8x128xf32>
    %251 = vector.extract_strided_slice %231 {offsets = [0, 256], sizes = [8, 128], strides = [1, 1]} : vector<8x384xf32> to vector<8x128xf32>
    %252 = arith.mulf %247, %224 : vector<8x128xf32>
    %253 = arith.addf %251, %252 : vector<8x128xf32>
    %254 = math.tanh %253 : vector<8x128xf32>
    %255 = arith.mulf %250, %254 : vector<8x128xf32>
    %256 = arith.addf %248, %255 : vector<8x128xf32>
    %257 = arith.index_cast %c7_i32 : i32 to index
    %c0_66 = arith.constant 0 : index
    %c0_67 = arith.constant 0 : index
    %258 = vector.load %arg4[%257, %c0_66, %c0_67] : memref<8x8x128xf32, #tpu.memory_space<vmem>>, vector<1x8x128xf32>
    %259 = vector.shape_cast %258 : vector<1x8x128xf32> to vector<8x128xf32>
    %260 = vector.shape_cast %256 : vector<8x128xf32> to vector<1x8x128xf32>
    tpu.vector_store %arg4[%257, %c0_66, %c0_67], %260 {strides = array<i32>} : memref<8x8x128xf32, #tpu.memory_space<vmem>>, vector<1x8x128xf32>,
    %c8_i32 = arith.constant 8 : i32
    %c0_68 = arith.constant 0 : index
    %c0_69 = arith.constant 0 : index
    %261 = vector.load %arg5[%c0_68, %c0_69] : memref<8x128xf32, #tpu.memory_space<vmem>>, vector<8x128xf32>
    tpu.vector_store %arg5[%c0_68, %c0_69], %256 {strides = array<i32>} : memref<8x128xf32, #tpu.memory_space<vmem>>, vector<8x128xf32>,
    return
  }
  func.func @transform_0(%arg0: i32) -> (i32, i32, i32) {
    %c0_i32 = arith.constant 0 : i32
    %c0_i32_0 = arith.constant 0 : i32
    %c0_i32_1 = arith.constant 0 : i32
    return %arg0, %c0_i32, %c0_i32_0 : i32, i32, i32
  }
  func.func @transform_1(%arg0: i32) -> (i32, i32) {
    %c0_i32 = arith.constant 0 : i32
    %c0_i32_0 = arith.constant 0 : i32
    %c0_i32_1 = arith.constant 0 : i32
    return %c0_i32, %c0_i32_0 : i32, i32
  }
  func.func @transform_2(%arg0: i32) -> (i32, i32) {
    %c0_i32 = arith.constant 0 : i32
    %c0_i32_0 = arith.constant 0 : i32
    %c0_i32_1 = arith.constant 0 : i32
    return %c0_i32, %c0_i32_0 : i32, i32
  }
  func.func @transform_3(%arg0: i32) -> (i32, i32, i32) {
    %c0_i32 = arith.constant 0 : i32
    %c0_i32_0 = arith.constant 0 : i32
    %c0_i32_1 = arith.constant 0 : i32
    return %arg0, %c0_i32, %c0_i32_0 : i32, i32, i32
  }
}

</mosaic_0001>

<llo_original>
// kernel: nbrc_forward.1
$region0: #{nbrc_forward.1}
  #allocation0 [shape = 'u32[]', space=smem, size = 0x4, offset = 0x4, fixed_abs, tag = 'smem constant byte address 0x4 - core index']
  #allocation1 [shape = 'u32[144,128]{1,0:T(1,128)}', space=vmem, size = 0x12000, scoped, tag = 'internal scratch']
  #allocation2 [shape = 'f32[8,128]{1,0:T(8,128)}', space=vmem, size = 0x1000, scoped, tag = 'scratch operand']
  %s0 = inlined_call_operand.vmem [shape: f32[8,8,384], index: 0, kind: input, shape index: {}]
  %s1 = inlined_call_operand.vmem [shape: f32[8,128], index: 1, kind: input, shape index: {}]
  %s2 = inlined_call_operand.vmem [shape: bf16[128,256], index: 2, kind: input, shape index: {}]
  %s3 = inlined_call_operand.vmem [shape: f32[8,8,128], index: 3, kind: output, shape index: {}]
  %s4 = sld [smem:[#allocation0]]
  $region26: #{nbrc_forward.1} parent=0
    _
  %s6 = ssub.s32 1, %s4
  %s7 = scalar_select 0, %s6, %s4
  // Predicated region
  $region2: #{nbrc_forward.1} parent=0 // pred_check
    _
  $region3: #{nbrc_forward.1} parent=0 // pred_check_branch
    %9 = sbr.rel (0) target = $region5
  $region4: #{nbrc_forward.1} parent=0 // pred_region
    _
  $region5: #{nbrc_forward.1} parent=0 // pred_fallthru
    _
  // Predicated region
  $region6: #{nbrc_forward.1} parent=0 // pred_check
    _
  $region7: #{nbrc_forward.1} parent=0 // pred_check_branch
    %11 = sbr.rel (0) target = $region9
  $region8: #{nbrc_forward.1} parent=0 // pred_region
    _
  $region9: #{nbrc_forward.1} parent=0 // pred_fallthru
    _
  // Predicated region
  $region10: #{nbrc_forward.1} parent=0 // pred_check
    _
  $region11: #{nbrc_forward.1} parent=0 // pred_check_branch
    %13 = sbr.rel (0) target = $region13
  $region12: #{nbrc_forward.1} parent=0 // pred_region
    _
  $region13: #{nbrc_forward.1} parent=0 // pred_fallthru
    _
  %p15 = scmp.eq.s32.totalorder 0, 0
  // Predicated region
  $region14: #{nbrc_forward.1} parent=0 // pred_check
    %p16 = pneg %p15
  $region15: #{nbrc_forward.1} parent=0 // pred_check_branch
    %18 = sbr.rel (%p16) target = $region17
  $region16: #{nbrc_forward.1} parent=0 // pred_region
    %v19 = vld [vmem:[%s1] sm:$0xff]
    %20 = vst [vmem:[#allocation2] sm:$0xff] %v19
  $region17: #{nbrc_forward.1} parent=0 // pred_fallthru
    _
  %v21 = vld [vmem:[%s2] sm:$0xff]
  %v22 = vld [vmem:[%s2 + $0x8] sm:$0xff]
  %v23 = vld [vmem:[%s2 + $0x10] sm:$0xff]
  %v24 = vld [vmem:[%s2 + $0x18] sm:$0xff]
  %v25 = vld [vmem:[%s2 + $0x20] sm:$0xff]
  %v26 = vld [vmem:[%s2 + $0x28] sm:$0xff]
  %v27 = vld [vmem:[%s2 + $0x30] sm:$0xff]
  %v28 = vld [vmem:[%s2 + $0x38] sm:$0xff]
  %v29 = vld [vmem:[%s2 + $0x40] sm:$0xff]
  %v30 = vld [vmem:[%s2 + $0x48] sm:$0xff]
  %v31 = vld [vmem:[%s2 + $0x50] sm:$0xff]
  %v32 = vld [vmem:[%s2 + $0x58] sm:$0xff]
  %v33 = vld [vmem:[%s2 + $0x60] sm:$0xff]
  %v34 = vld [vmem:[%s2 + $0x68] sm:$0xff]
  %v35 = vld [vmem:[%s2 + $0x70] sm:$0xff]
  %v36 = vld [vmem:[%s2 + $0x78] sm:$0xff]
  %v37 = vld [vmem:[#allocation2] sm:$0xff]
  %v38 = vld [vmem:[%s0] sm:$0xff]
  %v39 = vld [vmem:[%s0 + $0x8] sm:$0xff]
  %v40 = vld [vmem:[%s0 + $0x10] sm:$0xff]
  %v41 = vpack.c.bf16 %v37, %v37
  %v58 = vunpack.c.l.b16 %v21
  %v59 = vunpack.c.h.b16 %v21
  %v60 = vunpack.c.l.b16 %v22
  %v61 = vunpack.c.h.b16 %v22
  %v62 = vunpack.c.l.b16 %v23
  %v63 = vunpack.c.h.b16 %v23
  %v64 = vunpack.c.l.b16 %v24
  %v65 = vunpack.c.h.b16 %v24
  %v66 = vunpack.c.l.b16 %v25
  %v67 = vunpack.c.h.b16 %v25
  %v68 = vunpack.c.l.b16 %v26
  %v69 = vunpack.c.h.b16 %v26
  %v70 = vunpack.c.l.b16 %v27
  %v71 = vunpack.c.h.b16 %v27
  %v72 = vunpack.c.l.b16 %v28
  %v73 = vunpack.c.h.b16 %v28
  %v74 = vunpack.c.l.b16 %v29
  %v75 = vunpack.c.h.b16 %v29
  %v76 = vunpack.c.l.b16 %v30
  %v77 = vunpack.c.h.b16 %v30
  %v78 = vunpack.c.l.b16 %v31
  %v79 = vunpack.c.h.b16 %v31
  %v80 = vunpack.c.l.b16 %v32
  %v81 = vunpack.c.h.b16 %v32
  %v82 = vunpack.c.l.b16 %v33
  %v83 = vunpack.c.h.b16 %v33
  %v84 = vunpack.c.l.b16 %v34
  %v85 = vunpack.c.h.b16 %v34
  %v86 = vunpack.c.l.b16 %v35
  %v87 = vunpack.c.h.b16 %v35
  %v88 = vunpack.c.l.b16 %v36
  %v89 = vunpack.c.h.b16 %v36
  %v90 = vpack.c.b16 %v60, %v58
  %v91 = vpack.c.b16 %v61, %v59
  %v92 = vpack.c.b16 %v64, %v62
  %v93 = vpack.c.b16 %v65, %v63
  %v94 = vpack.c.b16 %v68, %v66
  %v95 = vpack.c.b16 %v69, %v67
  %v96 = vpack.c.b16 %v72, %v70
  %v97 = vpack.c.b16 %v73, %v71
  %v98 = vpack.c.b16 %v76, %v74
  %v99 = vpack.c.b16 %v77, %v75
  %v100 = vpack.c.b16 %v80, %v78
  %v101 = vpack.c.b16 %v81, %v79
  %v102 = vpack.c.b16 %v84, %v82
  %v103 = vpack.c.b16 %v85, %v83
  %v104 = vpack.c.b16 %v88, %v86
  %v105 = vpack.c.b16 %v89, %v87
  %122 = vmatprep.subr.bf16.mxu0 %v91
  %123 = vmatpush1.bf16.msra.mxu0 %v90
  %124 = vmatprep.subr.bf16.mxu0 %v93
  %125 = vmatpush1.bf16.msra.mxu0 %v92
  %126 = vmatprep.subr.bf16.mxu0 %v95
  %127 = vmatpush1.bf16.msra.mxu0 %v94
  %128 = vmatprep.subr.bf16.mxu0 %v97
  %129 = vmatpush1.bf16.msra.mxu0 %v96
  %130 = vmatprep.subr.bf16.mxu0 %v99
  %131 = vmatpush1.bf16.msra.mxu0 %v98
  %132 = vmatprep.subr.bf16.mxu0 %v101
  %133 = vmatpush1.bf16.msra.mxu0 %v100
  %134 = vmatprep.subr.bf16.mxu0 %v103
  %135 = vmatpush1.bf16.msra.mxu0 %v102
  %136 = vmatprep.subr.bf16.mxu0 %v105
  %137 = vmatpush1.bf16.msra.mxu0 %v104
  %138 = vmatprep.subr.bf16.mxu0 0
  %139 = vmatpush1.bf16.msra.mxu0 0
  %140 = vmatprep.subr.bf16.mxu0 0
  %141 = vmatpush1.bf16.msra.mxu0 0
  %142 = vmatprep.subr.bf16.mxu0 0
  %143 = vmatpush1.bf16.msra.mxu0 0
  %144 = vmatprep.subr.bf16.mxu0 0
  %145 = vmatpush1.bf16.msra.mxu0 0
  %146 = vmatprep.subr.bf16.mxu0 0
  %147 = vmatpush1.bf16.msra.mxu0 0
  %148 = vmatprep.subr.bf16.mxu0 0
  %149 = vmatpush1.bf16.msra.mxu0 0
  %150 = vmatprep.subr.bf16.mxu0 0
  %151 = vmatpush1.bf16.msra.mxu0 0
  %152 = vmatprep.subr.bf16.mxu0 0
  %153 = vmatpush1.bf16.msra.mxu0 0
  %154 = vmatprep.mubr.bf16.mxu0 0
  %155 = vmatmul.mubr.bf16.gmra.mrb[0].mxu0 %v41
  %v156 = vpop.f32.mrb[0].mxu0
  %v157 = vadd.f32 0.0, %v156
  %v158 = vpop.f32.mrb[0].mxu0
  %v159 = vadd.f32 0.0, %v158
  %v160 = vpop.f32.mrb[0].mxu0
  %v161 = vpop.f32.mrb[0].mxu0
  %162 = vdwg.mxu0
  %v163 = vadd.f32 %v38, %v157
  %v164 = vxor.u32 %v163, 2147483648
  %v165 = vmul.f32 %v164, 1.442695
  %v166 = vpow.pop %v165
  %v167 = vadd.f32 %v166, 1.0
  %v168 = vrcp.pop %v167
  %v169 = vmul.f32 1.0, %v168
  %v170 = vadd.f32 %v39, %v159
  %v171 = vtanh.pop %v170
  %v172 = vadd.f32 %v171, 1.0
  %v173 = vmul.f32 %v169, %v37
  %v174 = vsub.f32 1.0, %v169
  %v175 = vmul.f32 %v172, %v37
  %v176 = vadd.f32 %v40, %v175
  %v177 = vtanh.pop %v176
  %v178 = vmul.f32 %v174, %v177
  %v179 = vadd.f32 %v173, %v178
  %180 = vst [vmem:[%s3] sm:$0xff] %v179
  %s181 = scalar_lea.vmem %s0, 24
  %v182 = vld [vmem:[%s181] sm:$0xff]
  %v183 = vld [vmem:[%s181 + $0x8] sm:$0xff]
  %v184 = vld [vmem:[%s181 + $0x10] sm:$0xff]
  %v185 = vpack.c.bf16 %v179, %v179
  %186 = vmatprep.subr.bf16.mxu0 %v91
  %187 = vmatpush1.bf16.msra.mxu0 %v90
  %188 = vmatprep.subr.bf16.mxu0 %v93
  %189 = vmatpush1.bf16.msra.mxu0 %v92
  %190 = vmatprep.subr.bf16.mxu0 %v95
  %191 = vmatpush1.bf16.msra.mxu0 %v94
  %192 = vmatprep.subr.bf16.mxu0 %v97
  %193 = vmatpush1.bf16.msra.mxu0 %v96
  %194 = vmatprep.subr.bf16.mxu0 %v99
  %195 = vmatpush1.bf16.msra.mxu0 %v98
  %196 = vmatprep.subr.bf16.mxu0 %v101
  %197 = vmatpush1.bf16.msra.mxu0 %v100
  %198 = vmatprep.subr.bf16.mxu0 %v103
  %199 = vmatpush1.bf16.msra.mxu0 %v102
  %200 = vmatprep.subr.bf16.mxu0 %v105
  %201 = vmatpush1.bf16.msra.mxu0 %v104
  %202 = vmatprep.subr.bf16.mxu0 0
  %203 = vmatpush1.bf16.msra.mxu0 0
  %204 = vmatprep.subr.bf16.mxu0 0
  %205 = vmatpush1.bf16.msra.mxu0 0
  %206 = vmatprep.subr.bf16.mxu0 0
  %207 = vmatpush1.bf16.msra.mxu0 0
  %208 = vmatprep.subr.bf16.mxu0 0
  %209 = vmatpush1.bf16.msra.mxu0 0
  %210 = vmatprep.subr.bf16.mxu0 0
  %211 = vmatpush1.bf16.msra.mxu0 0
  %212 = vmatprep.subr.bf16.mxu0 0
  %213 = vmatpush1.bf16.msra.mxu0 0
  %214 = vmatprep.subr.bf16.mxu0 0
  %215 = vmatpush1.bf16.msra.mxu0 0
  %216 = vmatprep.subr.bf16.mxu0 0
  %217 = vmatpush1.bf16.msra.mxu0 0
  %218 = vmatprep.mubr.bf16.mxu0 0
  %219 = vmatmul.mubr.bf16.gmra.mrb[0].mxu0 %v185
  %v220 = vpop.f32.mrb[0].mxu0
  %v221 = vadd.f32 0.0, %v220
  %v222 = vpop.f32.mrb[0].mxu0
  %v223 = vadd.f32 0.0, %v222
  %v224 = vpop.f32.mrb[0].mxu0
  %v225 = vpop.f32.mrb[0].mxu0
  %226 = vdwg.mxu0
  %v227 = vadd.f32 %v182, %v221
  %v228 = vxor.u32 %v227, 2147483648
  %v229 = vmul.f32 %v228, 1.442695
  %v230 = vpow.pop %v229
  %v231 = vadd.f32 %v230, 1.0
  %v232 = vrcp.pop %v231
  %v233 = vmul.f32 1.0, %v232
  %v234 = vadd.f32 %v183, %v223
  %v235 = vtanh.pop %v234
  %v236 = vadd.f32 %v235, 1.0
  %v237 = vmul.f32 %v233, %v179
  %v238 = vsub.f32 1.0, %v233
  %v239 = vmul.f32 %v236, %v179
  %v240 = vadd.f32 %v184, %v239
  %v241 = vtanh.pop %v240
  %v242 = vmul.f32 %v238, %v241
  %v243 = vadd.f32 %v237, %v242
  %s244 = scalar_lea.vmem %s3, 8
  %245 = vst [vmem:[%s244] sm:$0xff] %v243
  %s246 = scalar_lea.vmem %s0, 48
  %v247 = vld [vmem:[%s246] sm:$0xff]
  %v248 = vld [vmem:[%s246 + $0x8] sm:$0xff]
  %v249 = vld [vmem:[%s246 + $0x10] sm:$0xff]
  %v250 = vpack.c.bf16 %v243, %v243
  %251 = vmatprep.subr.bf16.mxu0 %v91
  %252 = vmatpush1.bf16.msra.mxu0 %v90
  %253 = vmatprep.subr.bf16.mxu0 %v93
  %254 = vmatpush1.bf16.msra.mxu0 %v92
  %255 = vmatprep.subr.bf16.mxu0 %v95
  %256 = vmatpush1.bf16.msra.mxu0 %v94
  %257 = vmatprep.subr.bf16.mxu0 %v97
  %258 = vmatpush1.bf16.msra.mxu0 %v96
  %259 = vmatprep.subr.bf16.mxu0 %v99
  %260 = vmatpush1.bf16.msra.mxu0 %v98
  %261 = vmatprep.subr.bf16.mxu0 %v101
  %262 = vmatpush1.bf16.msra.mxu0 %v100
  %263 = vmatprep.subr.bf16.mxu0 %v103
  %264 = vmatpush1.bf16.msra.mxu0 %v102
  %265 = vmatprep.subr.bf16.mxu0 %v105
  %266 = vmatpush1.bf16.msra.mxu0 %v104
  %267 = vmatprep.subr.bf16.mxu0 0
  %268 = vmatpush1.bf16.msra.mxu0 0
  %269 = vmatprep.subr.bf16.mxu0 0
  %270 = vmatpush1.bf16.msra.mxu0 0
  %271 = vmatprep.subr.bf16.mxu0 0
  %272 = vmatpush1.bf16.msra.mxu0 0
  %273 = vmatprep.subr.bf16.mxu0 0
  %274 = vmatpush1.bf16.msra.mxu0 0
  %275 = vmatprep.subr.bf16.mxu0 0
  %276 = vmatpush1.bf16.msra.mxu0 0
  %277 = vmatprep.subr.bf16.mxu0 0
  %278 = vmatpush1.bf16.msra.mxu0 0
  %279 = vmatprep.subr.bf16.mxu0 0
  %280 = vmatpush1.bf16.msra.mxu0 0
  %281 = vmatprep.subr.bf16.mxu0 0
  %282 = vmatpush1.bf16.msra.mxu0 0
  %283 = vmatprep.mubr.bf16.mxu0 0
  %284 = vmatmul.mubr.bf16.gmra.mrb[0].mxu0 %v250
  %v285 = vpop.f32.mrb[0].mxu0
  %v286 = vadd.f32 0.0, %v285
  %v287 = vpop.f32.mrb[0].mxu0
  %v288 = vadd.f32 0.0, %v287
  %v289 = vpop.f32.mrb[0].mxu0
  %v290 = vpop.f32.mrb[0].mxu0
  %291 = vdwg.mxu0
  %v292 = vadd.f32 %v247, %v286
  %v293 = vxor.u32 %v292, 2147483648
  %v294 = vmul.f32 %v293, 1.442695
  %v295 = vpow.pop %v294
  %v296 = vadd.f32 %v295, 1.0
  %v297 = vrcp.pop %v296
  %v298 = vmul.f32 1.0, %v297
  %v299 = vadd.f32 %v248, %v288
  %v300 = vtanh.pop %v299
  %v301 = vadd.f32 %v300, 1.0
  %v302 = vmul.f32 %v298, %v243
  %v303 = vsub.f32 1.0, %v298
  %v304 = vmul.f32 %v301, %v243
  %v305 = vadd.f32 %v249, %v304
  %v306 = vtanh.pop %v305
  %v307 = vmul.f32 %v303, %v306
  %v308 = vadd.f32 %v302, %v307
  %s309 = scalar_lea.vmem %s3, 16
  %310 = vst [vmem:[%s309] sm:$0xff] %v308
  %s311 = scalar_lea.vmem %s0, 72
  %v312 = vld [vmem:[%s311] sm:$0xff]
  %v313 = vld [vmem:[%s311 + $0x8] sm:$0xff]
  %v314 = vld [vmem:[%s311 + $0x10] sm:$0xff]
  %v315 = vpack.c.bf16 %v308, %v308
  %316 = vmatprep.subr.bf16.mxu0 %v91
  %317 = vmatpush1.bf16.msra.mxu0 %v90
  %318 = vmatprep.subr.bf16.mxu0 %v93
  %319 = vmatpush1.bf16.msra.mxu0 %v92
  %320 = vmatprep.subr.bf16.mxu0 %v95
  %321 = vmatpush1.bf16.msra.mxu0 %v94
  %322 = vmatprep.subr.bf16.mxu0 %v97
  %323 = vmatpush1.bf16.msra.mxu0 %v96
  %324 = vmatprep.subr.bf16.mxu0 %v99
  %325 = vmatpush1.bf16.msra.mxu0 %v98
  %326 = vmatprep.subr.bf16.mxu0 %v101
  %327 = vmatpush1.bf16.msra.mxu0 %v100
  %328 = vmatprep.subr.bf16.mxu0 %v103
  %329 = vmatpush1.bf16.msra.mxu0 %v102
  %330 = vmatprep.subr.bf16.mxu0 %v105
  %331 = vmatpush1.bf16.msra.mxu0 %v104
  %332 = vmatprep.subr.bf16.mxu0 0
  %333 = vmatpush1.bf16.msra.mxu0 0
  %334 = vmatprep.subr.bf16.mxu0 0
  %335 = vmatpush1.bf16.msra.mxu0 0
  %336 = vmatprep.subr.bf16.mxu0 0
  %337 = vmatpush1.bf16.msra.mxu0 0
  %338 = vmatprep.subr.bf16.mxu0 0
  %339 = vmatpush1.bf16.msra.mxu0 0
  %340 = vmatprep.subr.bf16.mxu0 0
  %341 = vmatpush1.bf16.msra.mxu0 0
  %342 = vmatprep.subr.bf16.mxu0 0
  %343 = vmatpush1.bf16.msra.mxu0 0
  %344 = vmatprep.subr.bf16.mxu0 0
  %345 = vmatpush1.bf16.msra.mxu0 0
  %346 = vmatprep.subr.bf16.mxu0 0
  %347 = vmatpush1.bf16.msra.mxu0 0
  %348 = vmatprep.mubr.bf16.mxu0 0
  %349 = vmatmul.mubr.bf16.gmra.mrb[0].mxu0 %v315
  %v350 = vpop.f32.mrb[0].mxu0
  %v351 = vadd.f32 0.0, %v350
  %v352 = vpop.f32.mrb[0].mxu0
  %v353 = vadd.f32 0.0, %v352
  %v354 = vpop.f32.mrb[0].mxu0
  %v355 = vpop.f32.mrb[0].mxu0
  %356 = vdwg.mxu0
  %v357 = vadd.f32 %v312, %v351
  %v358 = vxor.u32 %v357, 2147483648
  %v359 = vmul.f32 %v358, 1.442695
  %v360 = vpow.pop %v359
  %v361 = vadd.f32 %v360, 1.0
  %v362 = vrcp.pop %v361
  %v363 = vmul.f32 1.0, %v362
  %v364 = vadd.f32 %v313, %v353
  %v365 = vtanh.pop %v364
  %v366 = vadd.f32 %v365, 1.0
  %v367 = vmul.f32 %v363, %v308
  %v368 = vsub.f32 1.0, %v363
  %v369 = vmul.f32 %v366, %v308
  %v370 = vadd.f32 %v314, %v369
  %v371 = vtanh.pop %v370
  %v372 = vmul.f32 %v368, %v371
  %v373 = vadd.f32 %v367, %v372
  %s374 = scalar_lea.vmem %s3, 24
  %375 = vst [vmem:[%s374] sm:$0xff] %v373
  %s376 = scalar_lea.vmem %s0, 96
  %v377 = vld [vmem:[%s376] sm:$0xff]
  %v378 = vld [vmem:[%s376 + $0x8] sm:$0xff]
  %v379 = vld [vmem:[%s376 + $0x10] sm:$0xff]
  %v380 = vpack.c.bf16 %v373, %v373
  %381 = vmatprep.subr.bf16.mxu0 %v91
  %382 = vmatpush1.bf16.msra.mxu0 %v90
  %383 = vmatprep.subr.bf16.mxu0 %v93
  %384 = vmatpush1.bf16.msra.mxu0 %v92
  %385 = vmatprep.subr.bf16.mxu0 %v95
  %386 = vmatpush1.bf16.msra.mxu0 %v94
  %387 = vmatprep.subr.bf16.mxu0 %v97
  %388 = vmatpush1.bf16.msra.mxu0 %v96
  %389 = vmatprep.subr.bf16.mxu0 %v99
  %390 = vmatpush1.bf16.msra.mxu0 %v98
  %391 = vmatprep.subr.bf16.mxu0 %v101
  %392 = vmatpush1.bf16.msra.mxu0 %v100
  %393 = vmatprep.subr.bf16.mxu0 %v103
  %394 = vmatpush1.bf16.msra.mxu0 %v102
  %395 = vmatprep.subr.bf16.mxu0 %v105
  %396 = vmatpush1.bf16.msra.mxu0 %v104
  %397 = vmatprep.subr.bf16.mxu0 0
  %398 = vmatpush1.bf16.msra.mxu0 0
  %399 = vmatprep.subr.bf16.mxu0 0
  %400 = vmatpush1.bf16.msra.mxu0 0
  %401 = vmatprep.subr.bf16.mxu0 0
  %402 = vmatpush1.bf16.msra.mxu0 0
  %403 = vmatprep.subr.bf16.mxu0 0
  %404 = vmatpush1.bf16.msra.mxu0 0
  %405 = vmatprep.subr.bf16.mxu0 0
  %406 = vmatpush1.bf16.msra.mxu0 0
  %407 = vmatprep.subr.bf16.mxu0 0
  %408 = vmatpush1.bf16.msra.mxu0 0
  %409 = vmatprep.subr.bf16.mxu0 0
  %410 = vmatpush1.bf16.msra.mxu0 0
  %411 = vmatprep.subr.bf16.mxu0 0
  %412 = vmatpush1.bf16.msra.mxu0 0
  %413 = vmatprep.mubr.bf16.mxu0 0
  %414 = vmatmul.mubr.bf16.gmra.mrb[0].mxu0 %v380
  %v415 = vpop.f32.mrb[0].mxu0
  %v416 = vadd.f32 0.0, %v415
  %v417 = vpop.f32.mrb[0].mxu0
  %v418 = vadd.f32 0.0, %v417
  %v419 = vpop.f32.mrb[0].mxu0
  %v420 = vpop.f32.mrb[0].mxu0
  %421 = vdwg.mxu0
  %v422 = vadd.f32 %v377, %v416
  %v423 = vxor.u32 %v422, 2147483648
  %v424 = vmul.f32 %v423, 1.442695
  %v425 = vpow.pop %v424
  %v426 = vadd.f32 %v425, 1.0
  %v427 = vrcp.pop %v426
  %v428 = vmul.f32 1.0, %v427
  %v429 = vadd.f32 %v378, %v418
  %v430 = vtanh.pop %v429
  %v431 = vadd.f32 %v430, 1.0
  %v432 = vmul.f32 %v428, %v373
  %v433 = vsub.f32 1.0, %v428
  %v434 = vmul.f32 %v431, %v373
  %v435 = vadd.f32 %v379, %v434
  %v436 = vtanh.pop %v435
  %v437 = vmul.f32 %v433, %v436
  %v438 = vadd.f32 %v432, %v437
  %s439 = scalar_lea.vmem %s3, 32
  %440 = vst [vmem:[%s439] sm:$0xff] %v438
  %s441 = scalar_lea.vmem %s0, 120
  %v442 = vld [vmem:[%s441] sm:$0xff]
  %v443 = vld [vmem:[%s441 + $0x8] sm:$0xff]
  %v444 = vld [vmem:[%s441 + $0x10] sm:$0xff]
  %v445 = vpack.c.bf16 %v438, %v438
  %446 = vmatprep.subr.bf16.mxu0 %v91
  %447 = vmatpush1.bf16.msra.mxu0 %v90
  %448 = vmatprep.subr.bf16.mxu0 %v93
  %449 = vmatpush1.bf16.msra.mxu0 %v92
  %450 = vmatprep.subr.bf16.mxu0 %v95
  %451 = vmatpush1.bf16.msra.mxu0 %v94
  %452 = vmatprep.subr.bf16.mxu0 %v97
  %453 = vmatpush1.bf16.msra.mxu0 %v96
  %454 = vmatprep.subr.bf16.mxu0 %v99
  %455 = vmatpush1.bf16.msra.mxu0 %v98
  %456 = vmatprep.subr.bf16.mxu0 %v101
  %457 = vmatpush1.bf16.msra.mxu0 %v100
  %458 = vmatprep.subr.bf16.mxu0 %v103
  %459 = vmatpush1.bf16.msra.mxu0 %v102
  %460 = vmatprep.subr.bf16.mxu0 %v105
  %461 = vmatpush1.bf16.msra.mxu0 %v104
  %462 = vmatprep.subr.bf16.mxu0 0
  %463 = vmatpush1.bf16.msra.mxu0 0
  %464 = vmatprep.subr.bf16.mxu0 0
  %465 = vmatpush1.bf16.msra.mxu0 0
  %466 = vmatprep.subr.bf16.mxu0 0
  %467 = vmatpush1.bf16.msra.mxu0 0
  %468 = vmatprep.subr.bf16.mxu0 0
  %469 = vmatpush1.bf16.msra.mxu0 0
  %470 = vmatprep.subr.bf16.mxu0 0
  %471 = vmatpush1.bf16.msra.mxu0 0
  %472 = vmatprep.subr.bf16.mxu0 0
  %473 = vmatpush1.bf16.msra.mxu0 0
  %474 = vmatprep.subr.bf16.mxu0 0
  %475 = vmatpush1.bf16.msra.mxu0 0
  %476 = vmatprep.subr.bf16.mxu0 0
  %477 = vmatpush1.bf16.msra.mxu0 0
  %478 = vmatprep.mubr.bf16.mxu0 0
  %479 = vmatmul.mubr.bf16.gmra.mrb[0].mxu0 %v445
  %v480 = vpop.f32.mrb[0].mxu0
  %v481 = vadd.f32 0.0, %v480
  %v482 = vpop.f32.mrb[0].mxu0
  %v483 = vadd.f32 0.0, %v482
  %v484 = vpop.f32.mrb[0].mxu0
  %v485 = vpop.f32.mrb[0].mxu0
  %486 = vdwg.mxu0
  %v487 = vadd.f32 %v442, %v481
  %v488 = vxor.u32 %v487, 2147483648
  %v489 = vmul.f32 %v488, 1.442695
  %v490 = vpow.pop %v489
  %v491 = vadd.f32 %v490, 1.0
  %v492 = vrcp.pop %v491
  %v493 = vmul.f32 1.0, %v492
  %v494 = vadd.f32 %v443, %v483
  %v495 = vtanh.pop %v494
  %v496 = vadd.f32 %v495, 1.0
  %v497 = vmul.f32 %v493, %v438
  %v498 = vsub.f32 1.0, %v493
  %v499 = vmul.f32 %v496, %v438
  %v500 = vadd.f32 %v444, %v499
  %v501 = vtanh.pop %v500
  %v502 = vmul.f32 %v498, %v501
  %v503 = vadd.f32 %v497, %v502
  %s504 = scalar_lea.vmem %s3, 40
  %505 = vst [vmem:[%s504] sm:$0xff] %v503
  %s506 = scalar_lea.vmem %s0, 144
  %v507 = vld [vmem:[%s506] sm:$0xff]
  %v508 = vld [vmem:[%s506 + $0x8] sm:$0xff]
  %v509 = vld [vmem:[%s506 + $0x10] sm:$0xff]
  %v510 = vpack.c.bf16 %v503, %v503
  %511 = vmatprep.subr.bf16.mxu0 %v91
  %512 = vmatpush1.bf16.msra.mxu0 %v90
  %513 = vmatprep.subr.bf16.mxu0 %v93
  %514 = vmatpush1.bf16.msra.mxu0 %v92
  %515 = vmatprep.subr.bf16.mxu0 %v95
  %516 = vmatpush1.bf16.msra.mxu0 %v94
  %517 = vmatprep.subr.bf16.mxu0 %v97
  %518 = vmatpush1.bf16.msra.mxu0 %v96
  %519 = vmatprep.subr.bf16.mxu0 %v99
  %520 = vmatpush1.bf16.msra.mxu0 %v98
  %521 = vmatprep.subr.bf16.mxu0 %v101
  %522 = vmatpush1.bf16.msra.mxu0 %v100
  %523 = vmatprep.subr.bf16.mxu0 %v103
  %524 = vmatpush1.bf16.msra.mxu0 %v102
  %525 = vmatprep.subr.bf16.mxu0 %v105
  %526 = vmatpush1.bf16.msra.mxu0 %v104
  %527 = vmatprep.subr.bf16.mxu0 0
  %528 = vmatpush1.bf16.msra.mxu0 0
  %529 = vmatprep.subr.bf16.mxu0 0
  %530 = vmatpush1.bf16.msra.mxu0 0
  %531 = vmatprep.subr.bf16.mxu0 0
  %532 = vmatpush1.bf16.msra.mxu0 0
  %533 = vmatprep.subr.bf16.mxu0 0
  %534 = vmatpush1.bf16.msra.mxu0 0
  %535 = vmatprep.subr.bf16.mxu0 0
  %536 = vmatpush1.bf16.msra.mxu0 0
  %537 = vmatprep.subr.bf16.mxu0 0
  %538 = vmatpush1.bf16.msra.mxu0 0
  %539 = vmatprep.subr.bf16.mxu0 0
  %540 = vmatpush1.bf16.msra.mxu0 0
  %541 = vmatprep.subr.bf16.mxu0 0
  %542 = vmatpush1.bf16.msra.mxu0 0
  %543 = vmatprep.mubr.bf16.mxu0 0
  %544 = vmatmul.mubr.bf16.gmra.mrb[0].mxu0 %v510
  %v545 = vpop.f32.mrb[0].mxu0
  %v546 = vadd.f32 0.0, %v545
  %v547 = vpop.f32.mrb[0].mxu0
  %v548 = vadd.f32 0.0, %v547
  %v549 = vpop.f32.mrb[0].mxu0
  %v550 = vpop.f32.mrb[0].mxu0
  %551 = vdwg.mxu0
  %v552 = vadd.f32 %v507, %v546
  %v553 = vxor.u32 %v552, 2147483648
  %v554 = vmul.f32 %v553, 1.442695
  %v555 = vpow.pop %v554
  %v556 = vadd.f32 %v555, 1.0
  %v557 = vrcp.pop %v556
  %v558 = vmul.f32 1.0, %v557
  %v559 = vadd.f32 %v508, %v548
  %v560 = vtanh.pop %v559
  %v561 = vadd.f32 %v560, 1.0
  %v562 = vmul.f32 %v558, %v503
  %v563 = vsub.f32 1.0, %v558
  %v564 = vmul.f32 %v561, %v503
  %v565 = vadd.f32 %v509, %v564
  %v566 = vtanh.pop %v565
  %v567 = vmul.f32 %v563, %v566
  %v568 = vadd.f32 %v562, %v567
  %s569 = scalar_lea.vmem %s3, 48
  %570 = vst [vmem:[%s569] sm:$0xff] %v568
  %s571 = scalar_lea.vmem %s0, 168
  %v572 = vld [vmem:[%s571] sm:$0xff]
  %v573 = vld [vmem:[%s571 + $0x8] sm:$0xff]
  %v574 = vld [vmem:[%s571 + $0x10] sm:$0xff]
  %v575 = vpack.c.bf16 %v568, %v568
  %576 = vmatprep.subr.bf16.mxu0 %v91
  %577 = vmatpush1.bf16.msra.mxu0 %v90
  %578 = vmatprep.subr.bf16.mxu0 %v93
  %579 = vmatpush1.bf16.msra.mxu0 %v92
  %580 = vmatprep.subr.bf16.mxu0 %v95
  %581 = vmatpush1.bf16.msra.mxu0 %v94
  %582 = vmatprep.subr.bf16.mxu0 %v97
  %583 = vmatpush1.bf16.msra.mxu0 %v96
  %584 = vmatprep.subr.bf16.mxu0 %v99
  %585 = vmatpush1.bf16.msra.mxu0 %v98
  %586 = vmatprep.subr.bf16.mxu0 %v101
  %587 = vmatpush1.bf16.msra.mxu0 %v100
  %588 = vmatprep.subr.bf16.mxu0 %v103
  %589 = vmatpush1.bf16.msra.mxu0 %v102
  %590 = vmatprep.subr.bf16.mxu0 %v105
  %591 = vmatpush1.bf16.msra.mxu0 %v104
  %592 = vmatprep.subr.bf16.mxu0 0
  %593 = vmatpush1.bf16.msra.mxu0 0
  %594 = vmatprep.subr.bf16.mxu0 0
  %595 = vmatpush1.bf16.msra.mxu0 0
  %596 = vmatprep.subr.bf16.mxu0 0
  %597 = vmatpush1.bf16.msra.mxu0 0
  %598 = vmatprep.subr.bf16.mxu0 0
  %599 = vmatpush1.bf16.msra.mxu0 0
  %600 = vmatprep.subr.bf16.mxu0 0
  %601 = vmatpush1.bf16.msra.mxu0 0
  %602 = vmatprep.subr.bf16.mxu0 0
  %603 = vmatpush1.bf16.msra.mxu0 0
  %604 = vmatprep.subr.bf16.mxu0 0
  %605 = vmatpush1.bf16.msra.mxu0 0
  %606 = vmatprep.subr.bf16.mxu0 0
  %607 = vmatpush1.bf16.msra.mxu0 0
  %608 = vmatprep.mubr.bf16.mxu0 0
  %609 = vmatmul.mubr.bf16.gmra.mrb[0].mxu0 %v575
  %v610 = vpop.f32.mrb[0].mxu0
  %v611 = vadd.f32 0.0, %v610
  %v612 = vpop.f32.mrb[0].mxu0
  %v613 = vadd.f32 0.0, %v612
  %v614 = vpop.f32.mrb[0].mxu0
  %v615 = vpop.f32.mrb[0].mxu0
  %616 = vdwg.mxu0
  %v617 = vadd.f32 %v572, %v611
  %v618 = vxor.u32 %v617, 2147483648
  %v619 = vmul.f32 %v618, 1.442695
  %v620 = vpow.pop %v619
  %v621 = vadd.f32 %v620, 1.0
  %v622 = vrcp.pop %v621
  %v623 = vmul.f32 1.0, %v622
  %v624 = vadd.f32 %v573, %v613
  %v625 = vtanh.pop %v624
  %v626 = vadd.f32 %v625, 1.0
  %v627 = vmul.f32 %v623, %v568
  %v628 = vsub.f32 1.0, %v623
  %v629 = vmul.f32 %v626, %v568
  %v630 = vadd.f32 %v574, %v629
  %v631 = vtanh.pop %v630
  %v632 = vmul.f32 %v628, %v631
  %v633 = vadd.f32 %v627, %v632
  %s634 = scalar_lea.vmem %s3, 56
  %635 = vst [vmem:[%s634] sm:$0xff] %v633
  %636 = vst [vmem:[#allocation2] sm:$0xff] %v633
  // Predicated region
  $region18: #{nbrc_forward.1} parent=0 // pred_check
    _
  $region19: #{nbrc_forward.1} parent=0 // pred_check_branch
    %638 = sbr.rel (0) target = $region21
  $region20: #{nbrc_forward.1} parent=0 // pred_region
    _
  $region21: #{nbrc_forward.1} parent=0 // pred_fallthru
    _
  // Predicated region
  $region22: #{nbrc_forward.1} parent=0 // pred_check
    _
  $region23: #{nbrc_forward.1} parent=0 // pred_check_branch
    %640 = sbr.rel (0) target = $region25
  $region24: #{nbrc_forward.1} parent=0 // pred_region
    _
  $region25: #{nbrc_forward.1} parent=0 // pred_fallthru
    _

</llo_original>
